<compile_context>
chip_gen: v5e
topology: v5e:2x2
jax: 0.10.0
libtpu: 0.0.40
codegen_flags: <defaults>
</compile_context>

<pallas_src>
import jax
import jax.numpy as jnp
from jax.experimental import pallas as pl
from jax.experimental.pallas import tpu as pltpu


# ----------------------------------------------------------------------------
# Pallas kernel: broadcast rows of the resident (B, Dpad) slab into the
# (tb, ts, Dpad) output block of the current grid step.
# ----------------------------------------------------------------------------
def _repeat_kernel(x_ref, out_ref):
    # x_ref  : (B, Dpad)       whole packed-param slab, VMEM-resident (no per-step DMA)
    # out_ref: (tb, ts, Dpad)  lane-dense (Dpad % 128 == 0) output block
    tb = out_ref.shape[0]
    b0 = pl.multiple_of(pl.program_id(0) * tb, tb)
    x = x_ref[pl.ds(b0, tb), :]                              # (tb, Dpad)
    out_ref[...] = jnp.broadcast_to(x[:, None, :], out_ref.shape)


def _sublane_align(dtype):
    """Native sublane pack of the dtype: 8 rows for 4-byte, 16 for 2-byte, 32 for 1-byte."""
    return {4: 8, 2: 16, 1: 32}.get(jnp.dtype(dtype).itemsize, 8)


def _repeat_pallas(x, sample_num, *, budget_bytes=8 << 20):
    """x: (B, Dpad) with Dpad % 128 == 0.  Returns (B, S, Dpad) with out[b, s] == x[b]."""
    B, Dpad = int(x.shape[0]), int(x.shape[1])
    S = int(sample_num)
    itemsize = x.dtype.itemsize
    align = _sublane_align(x.dtype)
    row_bytes = Dpad * itemsize

    # Whole param slab stays resident in VMEM; shrink the per-block budget if it
    # is unexpectedly large so (input + 2 output buffers) stays well under the
    # smallest physical VMEM (v7x: 64 MiB).
    in_bytes = B * row_bytes
    budget_bytes = int(min(budget_bytes, max(1 << 20, ((40 << 20) - in_bytes) // 2)))

    # --- S tile (second-to-last dim of the 3-D output block) ----------------
    # Legal iff it is a multiple of the dtype's sublane pack OR equals full S.
    ts_target = max(align, budget_bytes // max(1, row_bytes))
    if S <= ts_target:
        ts = S                                   # full extent: always legal
    else:
        ts = (ts_target // align) * align        # >= align by construction

    # --- B tile (outermost dim of the 3-D block: no (8,128) constraint) -----
    blk_bytes = ts * row_bytes
    tb_target = max(1, budget_bytes // max(1, blk_bytes))
    if B <= tb_target:
        tb = B
    else:
        tb = max(d for d in range(1, tb_target + 1) if B % d == 0)

    grid = (B // tb, pl.cdiv(S, ts))             # last S block may be partial (masked writes)
    out_blk_bytes = tb * ts * row_bytes
    vmem_limit = int(min(max(in_bytes + 2 * out_blk_bytes + (8 << 20), 32 << 20), 60 << 20))

    return pl.pallas_call(
        _repeat_kernel,
        out_shape=jax.ShapeDtypeStruct((B, S, Dpad), x.dtype),
        grid=grid,
        in_specs=[pl.BlockSpec(memory_space=pltpu.MemorySpace.VMEM)],
        out_specs=pl.BlockSpec((tb, ts, Dpad), lambda i, j: (i, j, 0)),
        compiler_params=pltpu.CompilerParams(
            dimension_semantics=("parallel", "parallel"),
            vmem_limit_bytes=vmem_limit),
        cost_estimate=pl.CostEstimate(
            flops=0, transcendentals=0,
            bytes_accessed=int(B * S * row_bytes + in_bytes)),
    )(x)


# ----------------------------------------------------------------------------
# Forward-pass wrapper (tensor-level work of Surrogateded.forward)
# ----------------------------------------------------------------------------
def midro_forward(params, proba, *, compute_solver_inputs=True):
    """Forward tensor work of Surrogateded.forward.

    Returns (ones_out, solver_inputs):
      ones_out      : (B, 1, 1) float32  -- the layer output (torch.ones in the reference)
      solver_inputs : dict with the packed, lane-dense repeated-parameter slab
                      {"packed": (B*S, Dpad), "dims": [...], "total_dim": Dtot,
                       "sample_num": S}, or None when compute_solver_inputs=False.
                      Row b*S + s of "packed" equals the concatenated params of batch b,
                      i.e. the packed form of np.repeat(p, S, axis=0) for every p.
    """
    params = [jnp.asarray(p) for p in params]
    B = int(params[0].shape[0])
    total = int(proba.shape[0])
    if total % B != 0:
        raise ValueError(
            f"len(proba)={total} must be an exact multiple of the batch ({B}) "
            "to match np.repeat semantics in the reference forward.")
    sample_num = total // B

    # Surrogateded.forward return value: torch.ones((real_batch, 1, 1)).
    ones_out = jnp.ones((B, 1, 1), jnp.float32)

    if not compute_solver_inputs:
        return ones_out, None

    dtype = jnp.result_type(*params)
    params = [p.astype(dtype).reshape(B, -1) for p in params]
    dims = [int(p.shape[1]) for p in params]

    # Pack into one lane-dense slab: (B, Dtot) -> (B, Dpad), Dpad % 128 == 0.
    # These ops touch only the tiny un-repeated (B, Dtot) arrays.
    packed = params[0] if len(params) == 1 else jnp.concatenate(params, axis=1)
    Dtot = int(packed.shape[1])
    Dpad = ((Dtot + 127) // 128) * 128
    if Dpad != Dtot:
        packed = jnp.pad(packed, ((0, 0), (0, Dpad - Dtot)))

    rep = _repeat_pallas(packed, sample_num)                 # (B, S, Dpad)
    # Merge the two leading dims; layout-compatible (free) whenever S is a
    # multiple of the sublane pack, tiny otherwise.
    rep = rep.reshape(B * sample_num, Dpad)

    solver_inputs = {
        "packed": rep,
        "dims": dims,
        "total_dim": Dtot,
        "sample_num": sample_num,
    }
    return ones_out, solver_inputs


def split_solver_params(solver_inputs):
    """Materialize per-parameter np.repeat(p, S, axis=0) arrays from the packed slab.

    NOTE: this re-reads the (B*S, Dpad) slab once per parameter; call it only
    where the individual arrays are actually consumed (validation / interop).
    The forward path itself keeps the slab packed to avoid extra HBM passes.
    """
    rep = solver_inputs["packed"]
    out, off = [], 0
    for d in solver_inputs["dims"]:
        out.append(rep[:, off:off + d])
        off += d
    return out


class MIDROLayer:
    """JAX/Pallas port of MIDROLayer's forward pass."""

    def __init__(self, energy_coef=1.0):
        # deterministic buffers, exactly as in the PyTorch __init__
        self.xdp = jnp.array([[0.0], [0.0], [0.0], [1.0]], jnp.float32)
        self.y = jnp.array([[0.0]], jnp.float32)
        self.proba = jnp.array([[1.0]], jnp.float32)
        self.obj_opt = jnp.array([[0.0]], jnp.float32)
        self.energy = float(energy_coef)
        self._solver_inputs = None
        # TODO(synk): cvxpy compiler (apply_parameters / split_solution), SCS cone
        # dims and diffcp.solve_and_derivative_batch (plus the custom backward)
        # have no Pallas equivalent; only the tensor-level forward (param
        # batch-repeat + ones output) is ported.

    def data_update(self, xdp, prob, obj_opt, y):
        self.xdp = xdp
        self.proba = prob
        self.obj_opt = obj_opt
        self.y = y

    def forward(self, *params, compute_solver_inputs=False):
        # The repeated params only feed the (unported) cone solver; by default
        # the repeat kernel is skipped so forward() pays no HBM cost for unused data.
        ones_out, solver_inputs = midro_forward(
            params, self.proba, compute_solver_inputs=compute_solver_inputs)
        self._solver_inputs = solver_inputs
        return ones_out

    __call__ = forward


if __name__ == "__main__":
    key = jax.random.PRNGKey(0)
    B, D, S = 2, 4, 4                     # batch, assets, scenario samples per batch
    k1, k2, k3 = jax.random.split(key, 3)

    # two DRO parameters (e.g. mean-return and risk parameters of the portfolio QP)
    param0 = jax.random.normal(k1, (B, D), dtype=jnp.float32)
    param1 = jax.random.normal(k2, (B, D), dtype=jnp.float32)

    layer = MIDROLayer(energy_coef=0.5)
    proba = jnp.full((B * S, 1), 1.0 / S, dtype=jnp.float32)
    obj_opt = jnp.zeros((B * S, 1), dtype=jnp.float32)
    y = jnp.zeros((B * S, 1), dtype=jnp.float32)
    layer.data_update(layer.xdp, proba, obj_opt, y)

    # forward semantics: ones((real_batch, 1, 1), float32); repeat kernel skipped
    out = jax.block_until_ready(layer.forward(param0, param1))
    assert out.shape == (B, 1, 1) and out.dtype == jnp.float32
    assert bool(jnp.all(out == 1.0))

    # exercise the Pallas repeat kernel (solver-input path) and validate it
    ones_out, solver_inputs = midro_forward(
        (param0, param1), proba, compute_solver_inputs=True)
    jax.block_until_ready(ones_out)
    packed = jax.block_until_ready(solver_inputs["packed"])
    assert packed.shape == (B * S, 128)
    reps = [jax.block_until_ready(r) for r in split_solver_params(solver_inputs)]
    assert bool(jnp.allclose(reps[0], jnp.repeat(param0, S, axis=0)))
    assert bool(jnp.allclose(reps[1], jnp.repeat(param1, S, axis=0)))

    # forward with solver inputs requested also runs the kernel
    out2 = jax.block_until_ready(layer.forward(param0, param1, compute_solver_inputs=True))
    assert bool(jnp.all(out2 == 1.0))
    assert layer._solver_inputs is not None

    # directly exercise the general tiling path: multi-step grid on both axes,
    # tb < B, and an S tile that does not divide S (masked final block).
    x_big = jax.random.normal(k3, (4, 256), dtype=jnp.float32)
    S_big = 20
    rep_big = jax.block_until_ready(
        _repeat_pallas(x_big, S_big, budget_bytes=8 * 1024))   # ts=8, tb=1, grid=(4,3)
    expected = jnp.broadcast_to(x_big[:, None, :], (4, S_big, 256))
    assert bool(jnp.allclose(rep_big, expected))

    print("KERNEL_OK")
</pallas_src>

<mosaic_0001>
module attributes {stable_mosaic.version = 11 : i64} {
  func.func @_repeat_kernel(%arg0: i32, %arg1: i32, %arg2: memref<2x128xf32, #tpu.memory_space<vmem>>, %arg3: memref<2x4x128xf32, #tpu.memory_space<vmem>>) attributes {dimension_semantics = [#tpu.dimension_semantics<parallel>, #tpu.dimension_semantics<parallel>], iteration_bounds = array<i64: 1, 1>, scalar_prefetch = 0 : i64, scratch_operands = 0 : i64, tpu.core_type = #tpu.core_type<tc>, window_params = [{pipeline_mode = #tpu.pipeline_mode<synchronous>, transform_indices = @transform_0, window_bounds = array<i64: 2, 128>}, {transform_indices = @transform_1, window_bounds = array<i64: 2, 4, 128>}]} {
    %c2_i32 = arith.constant 2 : i32
    %0 = arith.muli %arg0, %c2_i32 : i32
    %1 = tpu.assume_multiple %0, 2 : i32
    %2 = arith.index_cast %1 : i32 to index
    %c0 = arith.constant 0 : index
    %3 = vector.load %arg2[%2, %c0] : memref<2x128xf32, #tpu.memory_space<vmem>>, vector<2x128xf32>
    %4 = vector.shape_cast %3 : vector<2x128xf32> to vector<2x1x128xf32>
    %5 = vector.shape_cast %4 : vector<2x1x128xf32> to vector<2x1x128xf32>
    %6 = vector.broadcast %5 : vector<2x1x128xf32> to vector<2x4x128xf32>
    %c0_0 = arith.constant 0 : index
    %c0_1 = arith.constant 0 : index
    %c0_2 = arith.constant 0 : index
    %7 = vector.load %arg3[%c0_0, %c0_1, %c0_2] : memref<2x4x128xf32, #tpu.memory_space<vmem>>, vector<2x4x128xf32>
    tpu.vector_store %arg3[%c0_0, %c0_1, %c0_2], %6 {strides = array<i32>} : memref<2x4x128xf32, #tpu.memory_space<vmem>>, vector<2x4x128xf32>,
    return
  }
  func.func @transform_0(%arg0: i32, %arg1: i32) -> (i32, i32) {
    %c0_i32 = arith.constant 0 : i32
    %c0_i32_0 = arith.constant 0 : i32
    %c0_i32_1 = arith.constant 0 : i32
    return %c0_i32, %c0_i32_0 : i32, i32
  }
  func.func @transform_1(%arg0: i32, %arg1: i32) -> (i32, i32, i32) {
    %c0_i32 = arith.constant 0 : i32
    %c0_i32_0 = arith.constant 0 : i32
    return %arg0, %arg1, %c0_i32 : i32, i32, i32
  }
}

</mosaic_0001>

<llo_original>
// kernel: tpu_custom_call.1
$region0: #{tpu_custom_call.1}
  #allocation0 [shape = 'u32[]', space=smem, size = 0x4, offset = 0x4, fixed_abs, tag = 'smem constant byte address 0x4 - core index']
  #allocation1 [shape = 'u32[72,128]{1,0:T(1,128)}', space=vmem, size = 0x9000, scoped, tag = 'internal scratch']
  %s0 = inlined_call_operand.hbm [shape: f32[2,128], index: 0, kind: input, shape index: {}]
  %s1 = inlined_call_operand.hbm [shape: f32[2,4,128], index: 1, kind: output, shape index: {}]
  %s2 = sld [smem:[#allocation0]]
  $region18: #{tpu_custom_call.1} parent=0
    _
  %s4 = ssub.s32 1, %s2
  %s5 = scalar_select 0, %s4, %s2
  $region1: #{tpu_custom_call.1} parent=0
    #allocation2 [shape = 'u8[1024]{0}', space=vmem, size = 0x400, scoped, tag = 'input window, operand 0, single buffered']
    #allocation3 [shape = 's32[1]{0}', space=sflag, size = 0x4, scoped, tag = 'scoped memory for tpu_custom_call.1']
    #allocation4 [shape = 's32[1]{0}', space=sflag, size = 0x4, scoped, tag = 'scoped memory for tpu_custom_call.1']
    #allocation5 [shape = 'u8[4096]{0}', space=vmem, size = 0x1000, scoped, tag = 'output window, operand 0, single buffered']
    %6 = vsyncpa [#allocation3], 0
    %7 = vsyncpa [#allocation4], 0
    // Predicated region
    $region2: #{tpu_custom_call.1} parent=1 // pred_check
      _
    $region3: #{tpu_custom_call.1} parent=1 // pred_check_branch
      %9 = sbr.rel (0) target = $region5
    $region4: #{tpu_custom_call.1} parent=1 // pred_region
      %11 = vsyncadd [#allocation3], 0
      %s13 = sshll.u32 %s0, 4
      %s14 = int_to_ptr.hbm [resolvable:$true] %s13
      %s15 = sshll.u32 [#allocation2], 4
      %s16 = int_to_ptr.vmem [resolvable:$true] %s15
      %18 = dma.hbm_to_vmem [thread:$0]  %s14, 32, %s16, [#allocation3]
    $region5: #{tpu_custom_call.1} parent=1 // pred_fallthru
      _
    // Predicated region
    $region6: #{tpu_custom_call.1} parent=1 // pred_check
      _
    $region7: #{tpu_custom_call.1} parent=1 // pred_check_branch
      %20 = sbr.rel (0) target = $region9
    $region8: #{tpu_custom_call.1} parent=1 // pred_region
      %22 = dma.done [#allocation3], 32
    $region9: #{tpu_custom_call.1} parent=1 // pred_fallthru
      _
    %s23 = smul.u32 0, 2
    %s24 = scalar_lea.vmem [#allocation2], %s23
    %v25 = vld [vmem:[%s24] sm:$0x3]
    %v27 = vrot.slane %v25, 1
    %v28 = vperm.slane %v25, 0
    %v29 = vperm.slane %v27, 0
    %32 = vst [vmem:[#allocation5] sm:$0xf] %v28
    %33 = vst [vmem:[#allocation5 + $0x4] sm:$0xf] %v29
    // Predicated region
    $region10: #{tpu_custom_call.1} parent=1 // pred_check
      _
    $region11: #{tpu_custom_call.1} parent=1 // pred_check_branch
      %35 = sbr.rel (0) target = $region13
    $region12: #{tpu_custom_call.1} parent=1 // pred_region
      %37 = vsyncadd [#allocation4], 0
      %s38 = sshll.u32 [#allocation5], 4
      %s39 = int_to_ptr.vmem [resolvable:$true] %s38
      %s40 = sshll.u32 %s1, 4
      %s41 = int_to_ptr.hbm [resolvable:$true] %s40
      %46 = dma.vmem_to_hbm [thread:$0]  %s39, 128, %s41, [#allocation4], 64, 64, 4
    $region13: #{tpu_custom_call.1} parent=1 // pred_fallthru
      _
    // Predicated region
    $region14: #{tpu_custom_call.1} parent=1 // pred_check
      _
    $region15: #{tpu_custom_call.1} parent=1 // pred_check_branch
      %48 = sbr.rel (0) target = $region17
    $region16: #{tpu_custom_call.1} parent=1 // pred_region
      %50 = dma.done [#allocation4], 128
    $region17: #{tpu_custom_call.1} parent=1 // pred_fallthru
      _
    %51 = vsyncpa [#allocation3], 1
    %52 = vsyncpa [#allocation4], 1

</llo_original>
